<compile_context>
chip_gen: v5e
topology: v5e:2x2
jax: 0.10.0
libtpu: 0.0.40
codegen_flags: <defaults>
</compile_context>

<pallas_src>
from functools import partial

import jax
import jax.numpy as jnp
from jax.experimental import pallas as pl
from jax.experimental.pallas import tpu as pltpu

NUM_MESSAGE_PASSING = 6   # SAMPNGNN default
OUT_LANES = 128           # lane-dense output slab width (>= num_tasks)


def _round_up(x, m):
  return -(-x // m) * m


def pack_params(params, hidden, node_out):
  """Pack the 15 weight/bias arrays into two contiguous f32 slabs.

  Slab 1 (wp): every weight/bias whose lane width is hidden or node_out,
  stacked along rows (each block's rows padded to a multiple of 8 so all
  in-kernel slices are sublane-tile aligned).
  Slab 2 (w3): the final head layer (W3, b3), lane-padded to OUT_LANES so the
  kernel's output store is lane-dense.
  """
  (w_in_n, w_in_e, b_in, w_h, b_h, w_ah, b_ah, w_o, b_o,
   p1_w, p1_b, p2_w, p2_b, p3_w, p3_b) = params
  cw = max(hidden, node_out)

  def pad_block(a, lanes):
    r, c = a.shape
    return jnp.pad(a.astype(jnp.float32),
                   ((0, _round_up(r, 8) - r), (0, lanes - c)))

  blocks = [w_in_n, w_in_e, b_in, w_h, b_h, w_ah, b_ah, w_o, b_o,
            p1_w, p1_b, p2_w, p2_b]
  offsets, padded, row = [], [], 0
  for a in blocks:
    offsets.append(row)
    pa = pad_block(a, cw)
    padded.append(pa)
    row += pa.shape[0]
  wp = jnp.concatenate(padded, axis=0)                        # (R, cw)

  w3 = jnp.concatenate([pad_block(p3_w, OUT_LANES),
                        pad_block(p3_b, OUT_LANES)], axis=0)  # (rows, 128)
  return wp, w3, tuple(offsets)


def make_kernel(node_in, edge_in, hidden, node_out, offsets):
  (o_win_n, o_win_e, o_bin, o_wh, o_bh, o_wah, o_bah, o_wo, o_bo,
   o_p1w, o_p1b, o_p2w, o_p2b) = offsets
  o_p3b = _round_up(node_out, 8)
  bf16 = jnp.bfloat16
  dotf = partial(jnp.dot, preferred_element_type=jnp.float32)

  def kernel(s_ref, a_ref, x_ref, e_ref, wp_ref, w3_ref, out_ref):
    # --- hoisted, loop-invariant parameter loads (bf16 operands for MXU) ----
    w_in_n = wp_ref[o_win_n:o_win_n + node_in, 0:hidden].astype(bf16)
    w_in_e = wp_ref[o_win_e:o_win_e + edge_in, 0:hidden].astype(bf16)
    b_in   = wp_ref[o_bin:o_bin + 1, 0:hidden]
    w_h    = wp_ref[o_wh:o_wh + hidden, 0:hidden].astype(bf16)
    b_h    = wp_ref[o_bh:o_bh + 1, 0:hidden]
    w_ah   = wp_ref[o_wah:o_wah + node_in, 0:hidden].astype(bf16)
    b_ah   = wp_ref[o_bah:o_bah + 1, 0:hidden]
    w_o    = wp_ref[o_wo:o_wo + hidden, 0:node_out].astype(bf16)
    b_o    = wp_ref[o_bo:o_bo + 1, 0:node_out]
    p1_w   = wp_ref[o_p1w:o_p1w + node_out, 0:node_out].astype(bf16)
    p1_b   = wp_ref[o_p1b:o_p1b + 1, 0:node_out]
    p2_w   = wp_ref[o_p2w:o_p2w + node_out, 0:node_out].astype(bf16)
    p2_b   = wp_ref[o_p2b:o_p2b + 1, 0:node_out]
    p3_w   = w3_ref[0:node_out, :].astype(bf16)               # (O, 128)
    p3_b   = w3_ref[o_p3b:o_p3b + 1, :]                        # (1, 128)

    S = s_ref[0]                            # (E, N) bf16, exact 0/1
    A = a_ref[0]                            # (N, E) bf16, exact 0/1
    x = x_ref[0].astype(bf16)               # (N, Fn)
    e = e_ref[0].astype(bf16)               # (E, Fe)
    n_nodes = x.shape[0]

    # --- SAMPNGNN: initial messages = relu(W_in(cat(src_feats, edge_feats)))
    src_x = dotf(S, x).astype(bf16)                            # (E, Fn)
    h0 = dotf(src_x, w_in_n) + dotf(e, w_in_e) + b_in          # (E, H) f32
    messages = jnp.maximum(h0, 0.0)

    # --- SAMPNConv message passing (shared weights, no inner activation) ----
    for _ in range(NUM_MESSAGE_PASSING):
      nsum_nodes = dotf(A, messages.astype(bf16))              # (N, H) sum@dst
      nsum_edges = dotf(S, nsum_nodes.astype(bf16)) - messages # (E, H)
      messages = h0 + dotf(nsum_edges.astype(bf16), w_h) + b_h

    # --- node readout: relu(W_o(W_ah(x) + neighbor_sum)) --------------------
    nsum = dotf(A, messages.astype(bf16))                      # (N, H)
    pre = (dotf(x, w_ah) + b_ah + nsum).astype(bf16)
    node_hidden = jnp.maximum(dotf(pre, w_o) + b_o, 0.0)       # (N, O) f32

    # --- self-attention: softmax(H @ H^T, dim=0) @ H + H --------------------
    hb = node_hidden.astype(bf16)
    logits = jax.lax.dot_general(hb, hb, (((1,), (1,)), ((), ())),
                                 preferred_element_type=jnp.float32)  # (N, N)
    m = jnp.max(logits, axis=0, keepdims=True)                 # softmax dim=0
    ex = jnp.exp(logits - m)
    denom = jnp.sum(ex, axis=0, keepdims=True)
    w_att = ex * pl.reciprocal(denom, approx=True)             # EUP recip
    out_nodes = dotf(w_att.astype(bf16), hb) + node_hidden     # (N, O)

    # --- AvgPooling readout + predict MLP (Dropout(p=0) == identity) --------
    graph = (jnp.sum(out_nodes, axis=0, keepdims=True)
             * (1.0 / n_nodes)).astype(bf16)                   # (1, O)
    h = jnp.maximum(dotf(graph, p1_w) + p1_b, 0.0).astype(bf16)
    h = jnp.maximum(dotf(h, p2_w) + p2_b, 0.0).astype(bf16)
    out_ref[0] = dotf(h, p3_w) + p3_b                          # (1, 128) lane-dense

  return kernel


@jax.jit
def sampn_forward(s_src, a_in, node_feats, edge_feats, params):
  G, E, N = s_src.shape
  node_in = node_feats.shape[-1]
  edge_in = edge_feats.shape[-1]
  hidden = params[0].shape[-1]     # w_in_n: (node_in, hidden)
  node_out = params[7].shape[-1]   # w_o: (hidden, node_out)
  num_tasks = params[-1].shape[-1]

  wp, w3, offsets = pack_params(params, hidden, node_out)
  kernel = make_kernel(node_in, edge_in, hidden, node_out, offsets)

  out = pl.pallas_call(
      kernel,
      out_shape=jax.ShapeDtypeStruct((G, 1, OUT_LANES), jnp.float32),
      grid=(G,),
      in_specs=[
          pl.BlockSpec((1, E, N), lambda g: (g, 0, 0)),         # S_src
          pl.BlockSpec((1, N, E), lambda g: (g, 0, 0)),         # A_in
          pl.BlockSpec((1, N, node_in), lambda g: (g, 0, 0)),   # node feats
          pl.BlockSpec((1, E, edge_in), lambda g: (g, 0, 0)),   # edge feats
          pl.BlockSpec(wp.shape, lambda g: (0, 0)),             # packed params (resident)
          pl.BlockSpec(w3.shape, lambda g: (0, 0)),             # packed head params
      ],
      out_specs=pl.BlockSpec((1, 1, OUT_LANES), lambda g: (g, 0, 0)),
      compiler_params=pltpu.CompilerParams(
          dimension_semantics=("parallel",)),
  )(s_src, a_in, node_feats, edge_feats, wp, w3)
  return out[:, 0, :num_tasks]


def init_params(key, node_in, edge_in, hidden, node_out, num_tasks):
  ks = jax.random.split(key, 16)
  scale = 0.1

  def lin(kw, kb, fin, fout):
    w = scale * jax.random.normal(kw, (fin, fout), jnp.float32)
    b = scale * jax.random.normal(kb, (1, fout), jnp.float32)
    return w, b

  # W_in: Linear(node_in + edge_in, hidden), split into node / edge blocks.
  w_in = scale * jax.random.normal(ks[0], (node_in + edge_in, hidden), jnp.float32)
  b_in = scale * jax.random.normal(ks[1], (1, hidden), jnp.float32)
  w_in_n, w_in_e = w_in[:node_in], w_in[node_in:]
  w_h, b_h = lin(ks[2], ks[3], hidden, hidden)           # W_h
  w_ah, b_ah = lin(ks[4], ks[5], node_in, hidden)        # W_ah
  w_o, b_o = lin(ks[6], ks[7], hidden, node_out)         # W_o
  p1_w, p1_b = lin(ks[8], ks[9], node_out, node_out)     # predict[0]
  p2_w, p2_b = lin(ks[10], ks[11], node_out, node_out)   # predict[3]
  p3_w, p3_b = lin(ks[12], ks[13], node_out, num_tasks)  # predict[6]
  return (w_in_n, w_in_e, b_in, w_h, b_h, w_ah, b_ah, w_o, b_o,
          p1_w, p1_b, p2_w, p2_b, p3_w, p3_b)


if __name__ == "__main__":
  key = jax.random.PRNGKey(0)
  # Batch of G small graphs, all padded to the same (N nodes, E edges).
  G, N, E = 8, 8, 16
  node_in, edge_in = 16, 8     # input feature sizes
  hidden, node_out = 32, 32    # message_hidden_feats, node_out_feats
  num_tasks = 1

  k_x, k_e, k_src, k_dst, k_p = jax.random.split(key, 5)
  node_feats = jax.random.normal(k_x, (G, N, node_in), jnp.float32)
  edge_feats = jax.random.normal(k_e, (G, E, edge_in), jnp.float32)
  src = jax.random.randint(k_src, (G, E), 0, N)
  dst = jax.random.randint(k_dst, (G, E), 0, N)
  # One-hot incidence matrices; exact in bf16 (portable to v5e/v6e/v7x).
  s_src = jax.nn.one_hot(src, N, dtype=jnp.bfloat16)                     # (G, E, N)
  a_in = jnp.swapaxes(jax.nn.one_hot(dst, N, dtype=jnp.bfloat16), 1, 2)  # (G, N, E)

  params = init_params(k_p, node_in, edge_in, hidden, node_out, num_tasks)

  out = sampn_forward(s_src, a_in, node_feats, edge_feats, params)
  out = jax.block_until_ready(out)
  assert out.shape == (G, num_tasks)
  assert bool(jnp.all(jnp.isfinite(out)))
  print("KERNEL_OK")
</pallas_src>

<mosaic_0001>
module attributes {stable_mosaic.version = 11 : i64} {
  func.func @kernel(%arg0: i32, %arg1: memref<1x16x8xbf16, #tpu.memory_space<vmem>>, %arg2: memref<1x8x16xbf16, #tpu.memory_space<vmem>>, %arg3: memref<1x8x16xf32, #tpu.memory_space<vmem>>, %arg4: memref<1x16x8xf32, #tpu.memory_space<vmem>>, %arg5: memref<216x32xf32, #tpu.memory_space<vmem>>, %arg6: memref<40x128xf32, #tpu.memory_space<vmem>>, %arg7: memref<1x1x128xf32, #tpu.memory_space<vmem>>) attributes {dimension_semantics = [#tpu.dimension_semantics<parallel>], iteration_bounds = array<i64: 8>, scalar_prefetch = 0 : i64, scratch_operands = 0 : i64, tpu.core_type = #tpu.core_type<tc>, window_params = [{transform_indices = @transform_0, window_bounds = array<i64: 1, 16, 8>}, {transform_indices = @transform_1, window_bounds = array<i64: 1, 8, 16>}, {transform_indices = @transform_2, window_bounds = array<i64: 1, 8, 16>}, {transform_indices = @transform_3, window_bounds = array<i64: 1, 16, 8>}, {pipeline_mode = #tpu.pipeline_mode<synchronous>, transform_indices = @transform_4, window_bounds = array<i64: 216, 32>}, {pipeline_mode = #tpu.pipeline_mode<synchronous>, transform_indices = @transform_5, window_bounds = array<i64: 40, 128>}, {transform_indices = @transform_6, window_bounds = array<i64: 1, 1, 128>}]} {
    %c0 = arith.constant 0 : index
    %c0_0 = arith.constant 0 : index
    %0 = vector.load %arg5[%c0, %c0_0] : memref<216x32xf32, #tpu.memory_space<vmem>>, vector<16x32xf32>
    %1 = arith.truncf %0 : vector<16x32xf32> to vector<16x32xbf16>
    %c16 = arith.constant 16 : index
    %c0_1 = arith.constant 0 : index
    %2 = vector.load %arg5[%c16, %c0_1] : memref<216x32xf32, #tpu.memory_space<vmem>>, vector<8x32xf32>
    %3 = arith.truncf %2 : vector<8x32xf32> to vector<8x32xbf16>
    %c24 = arith.constant 24 : index
    %c0_2 = arith.constant 0 : index
    %4 = vector.load %arg5[%c24, %c0_2] : memref<216x32xf32, #tpu.memory_space<vmem>>, vector<1x32xf32>
    %c32 = arith.constant 32 : index
    %c0_3 = arith.constant 0 : index
    %5 = vector.load %arg5[%c32, %c0_3] : memref<216x32xf32, #tpu.memory_space<vmem>>, vector<32x32xf32>
    %6 = arith.truncf %5 : vector<32x32xf32> to vector<32x32xbf16>
    %c64 = arith.constant 64 : index
    %c0_4 = arith.constant 0 : index
    %7 = vector.load %arg5[%c64, %c0_4] : memref<216x32xf32, #tpu.memory_space<vmem>>, vector<1x32xf32>
    %c72 = arith.constant 72 : index
    %c0_5 = arith.constant 0 : index
    %8 = vector.load %arg5[%c72, %c0_5] : memref<216x32xf32, #tpu.memory_space<vmem>>, vector<16x32xf32>
    %9 = arith.truncf %8 : vector<16x32xf32> to vector<16x32xbf16>
    %c88 = arith.constant 88 : index
    %c0_6 = arith.constant 0 : index
    %10 = vector.load %arg5[%c88, %c0_6] : memref<216x32xf32, #tpu.memory_space<vmem>>, vector<1x32xf32>
    %c96 = arith.constant 96 : index
    %c0_7 = arith.constant 0 : index
    %11 = vector.load %arg5[%c96, %c0_7] : memref<216x32xf32, #tpu.memory_space<vmem>>, vector<32x32xf32>
    %12 = arith.truncf %11 : vector<32x32xf32> to vector<32x32xbf16>
    %c128 = arith.constant 128 : index
    %c0_8 = arith.constant 0 : index
    %13 = vector.load %arg5[%c128, %c0_8] : memref<216x32xf32, #tpu.memory_space<vmem>>, vector<1x32xf32>
    %c136 = arith.constant 136 : index
    %c0_9 = arith.constant 0 : index
    %14 = vector.load %arg5[%c136, %c0_9] : memref<216x32xf32, #tpu.memory_space<vmem>>, vector<32x32xf32>
    %15 = arith.truncf %14 : vector<32x32xf32> to vector<32x32xbf16>
    %c168 = arith.constant 168 : index
    %c0_10 = arith.constant 0 : index
    %16 = vector.load %arg5[%c168, %c0_10] : memref<216x32xf32, #tpu.memory_space<vmem>>, vector<1x32xf32>
    %c176 = arith.constant 176 : index
    %c0_11 = arith.constant 0 : index
    %17 = vector.load %arg5[%c176, %c0_11] : memref<216x32xf32, #tpu.memory_space<vmem>>, vector<32x32xf32>
    %18 = arith.truncf %17 : vector<32x32xf32> to vector<32x32xbf16>
    %c208 = arith.constant 208 : index
    %c0_12 = arith.constant 0 : index
    %19 = vector.load %arg5[%c208, %c0_12] : memref<216x32xf32, #tpu.memory_space<vmem>>, vector<1x32xf32>
    %c0_13 = arith.constant 0 : index
    %c0_14 = arith.constant 0 : index
    %20 = vector.load %arg6[%c0_13, %c0_14] : memref<40x128xf32, #tpu.memory_space<vmem>>, vector<32x128xf32>
    %21 = arith.truncf %20 : vector<32x128xf32> to vector<32x128xbf16>
    %c32_15 = arith.constant 32 : index
    %c0_16 = arith.constant 0 : index
    %22 = vector.load %arg6[%c32_15, %c0_16] : memref<40x128xf32, #tpu.memory_space<vmem>>, vector<1x128xf32>
    %c0_17 = arith.constant 0 : index
    %c0_18 = arith.constant 0 : index
    %c0_19 = arith.constant 0 : index
    %23 = vector.load %arg1[%c0_17, %c0_18, %c0_19] : memref<1x16x8xbf16, #tpu.memory_space<vmem>>, vector<1x16x8xbf16>
    %24 = vector.shape_cast %23 : vector<1x16x8xbf16> to vector<16x8xbf16>
    %c0_20 = arith.constant 0 : index
    %c0_21 = arith.constant 0 : index
    %c0_22 = arith.constant 0 : index
    %25 = vector.load %arg2[%c0_20, %c0_21, %c0_22] : memref<1x8x16xbf16, #tpu.memory_space<vmem>>, vector<1x8x16xbf16>
    %26 = vector.shape_cast %25 : vector<1x8x16xbf16> to vector<8x16xbf16>
    %c0_23 = arith.constant 0 : index
    %c0_24 = arith.constant 0 : index
    %c0_25 = arith.constant 0 : index
    %27 = vector.load %arg3[%c0_23, %c0_24, %c0_25] : memref<1x8x16xf32, #tpu.memory_space<vmem>>, vector<1x8x16xf32>
    %28 = vector.shape_cast %27 : vector<1x8x16xf32> to vector<8x16xf32>
    %29 = arith.truncf %28 : vector<8x16xf32> to vector<8x16xbf16>
    %c0_26 = arith.constant 0 : index
    %c0_27 = arith.constant 0 : index
    %c0_28 = arith.constant 0 : index
    %30 = vector.load %arg4[%c0_26, %c0_27, %c0_28] : memref<1x16x8xf32, #tpu.memory_space<vmem>>, vector<1x16x8xf32>
    %31 = vector.shape_cast %30 : vector<1x16x8xf32> to vector<16x8xf32>
    %32 = arith.truncf %31 : vector<16x8xf32> to vector<16x8xbf16>
    %cst = arith.constant dense<0.000000e+00> : vector<16x16xf32>
    %33 = tpu.matmul %24, %29, %cst {dimension_numbers = #tpu.dot_dimension_numbers<[1], [0], [0], [1], [0, 0, 1, 1], [], []>} : vector<16x8xbf16>, vector<8x16xbf16>, vector<16x16xf32> -> vector<16x16xf32>
    %34 = arith.truncf %33 : vector<16x16xf32> to vector<16x16xbf16>
    %cst_29 = arith.constant dense<0.000000e+00> : vector<16x32xf32>
    %35 = tpu.matmul %34, %1, %cst_29 {dimension_numbers = #tpu.dot_dimension_numbers<[1], [0], [0], [1], [0, 0, 1, 1], [], []>} : vector<16x16xbf16>, vector<16x32xbf16>, vector<16x32xf32> -> vector<16x32xf32>
    %cst_30 = arith.constant dense<0.000000e+00> : vector<16x32xf32>
    %36 = tpu.matmul %32, %3, %cst_30 {dimension_numbers = #tpu.dot_dimension_numbers<[1], [0], [0], [1], [0, 0, 1, 1], [], []>} : vector<16x8xbf16>, vector<8x32xbf16>, vector<16x32xf32> -> vector<16x32xf32>
    %37 = arith.addf %35, %36 : vector<16x32xf32>
    %38 = vector.broadcast %4 : vector<1x32xf32> to vector<16x32xf32>
    %39 = arith.addf %37, %38 : vector<16x32xf32>
    %cst_31 = arith.constant 0.000000e+00 : f32
    %40 = vector.broadcast %cst_31 : f32 to vector<16x32xf32>
    %41 = arith.maximumf %39, %40 : vector<16x32xf32>
    %42 = arith.truncf %41 : vector<16x32xf32> to vector<16x32xbf16>
    %cst_32 = arith.constant dense<0.000000e+00> : vector<8x32xf32>
    %43 = tpu.matmul %26, %42, %cst_32 {dimension_numbers = #tpu.dot_dimension_numbers<[1], [0], [0], [1], [0, 0, 1, 1], [], []>} : vector<8x16xbf16>, vector<16x32xbf16>, vector<8x32xf32> -> vector<8x32xf32>
    %44 = arith.truncf %43 : vector<8x32xf32> to vector<8x32xbf16>
    %cst_33 = arith.constant dense<0.000000e+00> : vector<16x32xf32>
    %45 = tpu.matmul %24, %44, %cst_33 {dimension_numbers = #tpu.dot_dimension_numbers<[1], [0], [0], [1], [0, 0, 1, 1], [], []>} : vector<16x8xbf16>, vector<8x32xbf16>, vector<16x32xf32> -> vector<16x32xf32>
    %46 = arith.subf %45, %41 : vector<16x32xf32>
    %47 = arith.truncf %46 : vector<16x32xf32> to vector<16x32xbf16>
    %cst_34 = arith.constant dense<0.000000e+00> : vector<16x32xf32>
    %48 = tpu.matmul %47, %6, %cst_34 {dimension_numbers = #tpu.dot_dimension_numbers<[1], [0], [0], [1], [0, 0, 1, 1], [], []>} : vector<16x32xbf16>, vector<32x32xbf16>, vector<16x32xf32> -> vector<16x32xf32>
    %49 = arith.addf %39, %48 : vector<16x32xf32>
    %50 = vector.broadcast %7 : vector<1x32xf32> to vector<16x32xf32>
    %51 = arith.addf %49, %50 : vector<16x32xf32>
    %52 = arith.truncf %51 : vector<16x32xf32> to vector<16x32xbf16>
    %cst_35 = arith.constant dense<0.000000e+00> : vector<8x32xf32>
    %53 = tpu.matmul %26, %52, %cst_35 {dimension_numbers = #tpu.dot_dimension_numbers<[1], [0], [0], [1], [0, 0, 1, 1], [], []>} : vector<8x16xbf16>, vector<16x32xbf16>, vector<8x32xf32> -> vector<8x32xf32>
    %54 = arith.truncf %53 : vector<8x32xf32> to vector<8x32xbf16>
    %cst_36 = arith.constant dense<0.000000e+00> : vector<16x32xf32>
    %55 = tpu.matmul %24, %54, %cst_36 {dimension_numbers = #tpu.dot_dimension_numbers<[1], [0], [0], [1], [0, 0, 1, 1], [], []>} : vector<16x8xbf16>, vector<8x32xbf16>, vector<16x32xf32> -> vector<16x32xf32>
    %56 = arith.subf %55, %51 : vector<16x32xf32>
    %57 = arith.truncf %56 : vector<16x32xf32> to vector<16x32xbf16>
    %cst_37 = arith.constant dense<0.000000e+00> : vector<16x32xf32>
    %58 = tpu.matmul %57, %6, %cst_37 {dimension_numbers = #tpu.dot_dimension_numbers<[1], [0], [0], [1], [0, 0, 1, 1], [], []>} : vector<16x32xbf16>, vector<32x32xbf16>, vector<16x32xf32> -> vector<16x32xf32>
    %59 = arith.addf %39, %58 : vector<16x32xf32>
    %60 = vector.broadcast %7 : vector<1x32xf32> to vector<16x32xf32>
    %61 = arith.addf %59, %60 : vector<16x32xf32>
    %62 = arith.truncf %61 : vector<16x32xf32> to vector<16x32xbf16>
    %cst_38 = arith.constant dense<0.000000e+00> : vector<8x32xf32>
    %63 = tpu.matmul %26, %62, %cst_38 {dimension_numbers = #tpu.dot_dimension_numbers<[1], [0], [0], [1], [0, 0, 1, 1], [], []>} : vector<8x16xbf16>, vector<16x32xbf16>, vector<8x32xf32> -> vector<8x32xf32>
    %64 = arith.truncf %63 : vector<8x32xf32> to vector<8x32xbf16>
    %cst_39 = arith.constant dense<0.000000e+00> : vector<16x32xf32>
    %65 = tpu.matmul %24, %64, %cst_39 {dimension_numbers = #tpu.dot_dimension_numbers<[1], [0], [0], [1], [0, 0, 1, 1], [], []>} : vector<16x8xbf16>, vector<8x32xbf16>, vector<16x32xf32> -> vector<16x32xf32>
    %66 = arith.subf %65, %61 : vector<16x32xf32>
    %67 = arith.truncf %66 : vector<16x32xf32> to vector<16x32xbf16>
    %cst_40 = arith.constant dense<0.000000e+00> : vector<16x32xf32>
    %68 = tpu.matmul %67, %6, %cst_40 {dimension_numbers = #tpu.dot_dimension_numbers<[1], [0], [0], [1], [0, 0, 1, 1], [], []>} : vector<16x32xbf16>, vector<32x32xbf16>, vector<16x32xf32> -> vector<16x32xf32>
    %69 = arith.addf %39, %68 : vector<16x32xf32>
    %70 = vector.broadcast %7 : vector<1x32xf32> to vector<16x32xf32>
    %71 = arith.addf %69, %70 : vector<16x32xf32>
    %72 = arith.truncf %71 : vector<16x32xf32> to vector<16x32xbf16>
    %cst_41 = arith.constant dense<0.000000e+00> : vector<8x32xf32>
    %73 = tpu.matmul %26, %72, %cst_41 {dimension_numbers = #tpu.dot_dimension_numbers<[1], [0], [0], [1], [0, 0, 1, 1], [], []>} : vector<8x16xbf16>, vector<16x32xbf16>, vector<8x32xf32> -> vector<8x32xf32>
    %74 = arith.truncf %73 : vector<8x32xf32> to vector<8x32xbf16>
    %cst_42 = arith.constant dense<0.000000e+00> : vector<16x32xf32>
    %75 = tpu.matmul %24, %74, %cst_42 {dimension_numbers = #tpu.dot_dimension_numbers<[1], [0], [0], [1], [0, 0, 1, 1], [], []>} : vector<16x8xbf16>, vector<8x32xbf16>, vector<16x32xf32> -> vector<16x32xf32>
    %76 = arith.subf %75, %71 : vector<16x32xf32>
    %77 = arith.truncf %76 : vector<16x32xf32> to vector<16x32xbf16>
    %cst_43 = arith.constant dense<0.000000e+00> : vector<16x32xf32>
    %78 = tpu.matmul %77, %6, %cst_43 {dimension_numbers = #tpu.dot_dimension_numbers<[1], [0], [0], [1], [0, 0, 1, 1], [], []>} : vector<16x32xbf16>, vector<32x32xbf16>, vector<16x32xf32> -> vector<16x32xf32>
    %79 = arith.addf %39, %78 : vector<16x32xf32>
    %80 = vector.broadcast %7 : vector<1x32xf32> to vector<16x32xf32>
    %81 = arith.addf %79, %80 : vector<16x32xf32>
    %82 = arith.truncf %81 : vector<16x32xf32> to vector<16x32xbf16>
    %cst_44 = arith.constant dense<0.000000e+00> : vector<8x32xf32>
    %83 = tpu.matmul %26, %82, %cst_44 {dimension_numbers = #tpu.dot_dimension_numbers<[1], [0], [0], [1], [0, 0, 1, 1], [], []>} : vector<8x16xbf16>, vector<16x32xbf16>, vector<8x32xf32> -> vector<8x32xf32>
    %84 = arith.truncf %83 : vector<8x32xf32> to vector<8x32xbf16>
    %cst_45 = arith.constant dense<0.000000e+00> : vector<16x32xf32>
    %85 = tpu.matmul %24, %84, %cst_45 {dimension_numbers = #tpu.dot_dimension_numbers<[1], [0], [0], [1], [0, 0, 1, 1], [], []>} : vector<16x8xbf16>, vector<8x32xbf16>, vector<16x32xf32> -> vector<16x32xf32>
    %86 = arith.subf %85, %81 : vector<16x32xf32>
    %87 = arith.truncf %86 : vector<16x32xf32> to vector<16x32xbf16>
    %cst_46 = arith.constant dense<0.000000e+00> : vector<16x32xf32>
    %88 = tpu.matmul %87, %6, %cst_46 {dimension_numbers = #tpu.dot_dimension_numbers<[1], [0], [0], [1], [0, 0, 1, 1], [], []>} : vector<16x32xbf16>, vector<32x32xbf16>, vector<16x32xf32> -> vector<16x32xf32>
    %89 = arith.addf %39, %88 : vector<16x32xf32>
    %90 = vector.broadcast %7 : vector<1x32xf32> to vector<16x32xf32>
    %91 = arith.addf %89, %90 : vector<16x32xf32>
    %92 = arith.truncf %91 : vector<16x32xf32> to vector<16x32xbf16>
    %cst_47 = arith.constant dense<0.000000e+00> : vector<8x32xf32>
    %93 = tpu.matmul %26, %92, %cst_47 {dimension_numbers = #tpu.dot_dimension_numbers<[1], [0], [0], [1], [0, 0, 1, 1], [], []>} : vector<8x16xbf16>, vector<16x32xbf16>, vector<8x32xf32> -> vector<8x32xf32>
    %94 = arith.truncf %93 : vector<8x32xf32> to vector<8x32xbf16>
    %cst_48 = arith.constant dense<0.000000e+00> : vector<16x32xf32>
    %95 = tpu.matmul %24, %94, %cst_48 {dimension_numbers = #tpu.dot_dimension_numbers<[1], [0], [0], [1], [0, 0, 1, 1], [], []>} : vector<16x8xbf16>, vector<8x32xbf16>, vector<16x32xf32> -> vector<16x32xf32>
    %96 = arith.subf %95, %91 : vector<16x32xf32>
    %97 = arith.truncf %96 : vector<16x32xf32> to vector<16x32xbf16>
    %cst_49 = arith.constant dense<0.000000e+00> : vector<16x32xf32>
    %98 = tpu.matmul %97, %6, %cst_49 {dimension_numbers = #tpu.dot_dimension_numbers<[1], [0], [0], [1], [0, 0, 1, 1], [], []>} : vector<16x32xbf16>, vector<32x32xbf16>, vector<16x32xf32> -> vector<16x32xf32>
    %99 = arith.addf %39, %98 : vector<16x32xf32>
    %100 = vector.broadcast %7 : vector<1x32xf32> to vector<16x32xf32>
    %101 = arith.addf %99, %100 : vector<16x32xf32>
    %102 = arith.truncf %101 : vector<16x32xf32> to vector<16x32xbf16>
    %cst_50 = arith.constant dense<0.000000e+00> : vector<8x32xf32>
    %103 = tpu.matmul %26, %102, %cst_50 {dimension_numbers = #tpu.dot_dimension_numbers<[1], [0], [0], [1], [0, 0, 1, 1], [], []>} : vector<8x16xbf16>, vector<16x32xbf16>, vector<8x32xf32> -> vector<8x32xf32>
    %cst_51 = arith.constant dense<0.000000e+00> : vector<8x32xf32>
    %104 = tpu.matmul %29, %9, %cst_51 {dimension_numbers = #tpu.dot_dimension_numbers<[1], [0], [0], [1], [0, 0, 1, 1], [], []>} : vector<8x16xbf16>, vector<16x32xbf16>, vector<8x32xf32> -> vector<8x32xf32>
    %105 = vector.broadcast %10 : vector<1x32xf32> to vector<8x32xf32>
    %106 = arith.addf %104, %105 : vector<8x32xf32>
    %107 = arith.addf %106, %103 : vector<8x32xf32>
    %108 = arith.truncf %107 : vector<8x32xf32> to vector<8x32xbf16>
    %cst_52 = arith.constant dense<0.000000e+00> : vector<8x32xf32>
    %109 = tpu.matmul %108, %12, %cst_52 {dimension_numbers = #tpu.dot_dimension_numbers<[1], [0], [0], [1], [0, 0, 1, 1], [], []>} : vector<8x32xbf16>, vector<32x32xbf16>, vector<8x32xf32> -> vector<8x32xf32>
    %110 = vector.broadcast %13 : vector<1x32xf32> to vector<8x32xf32>
    %111 = arith.addf %109, %110 : vector<8x32xf32>
    %cst_53 = arith.constant 0.000000e+00 : f32
    %112 = vector.broadcast %cst_53 : f32 to vector<8x32xf32>
    %113 = arith.maximumf %111, %112 : vector<8x32xf32>
    %114 = arith.truncf %113 : vector<8x32xf32> to vector<8x32xbf16>
    %cst_54 = arith.constant dense<0.000000e+00> : vector<8x8xf32>
    %115 = tpu.matmul %114, %114, %cst_54 {dimension_numbers = #tpu.dot_dimension_numbers<[1], [1], [0], [0], [0, 0, 1, 0], [], []>} : vector<8x32xbf16>, vector<8x32xbf16>, vector<8x8xf32> -> vector<8x8xf32>
    %cst_55 = arith.constant dense<0xFF800000> : vector<8xf32>
    %116 = vector.multi_reduction <maximumf>, %115, %cst_55 [0] : vector<8x8xf32> to vector<8xf32>
    %117 = vector.shape_cast %116 : vector<8xf32> to vector<1x8xf32>
    %118 = vector.broadcast %117 : vector<1x8xf32> to vector<8x8xf32>
    %119 = arith.subf %115, %118 : vector<8x8xf32>
    %120 = math.exp %119 : vector<8x8xf32>
    %cst_56 = arith.constant dense<0.000000e+00> : vector<8xf32>
    %121 = vector.multi_reduction <add>, %120, %cst_56 [0] : vector<8x8xf32> to vector<8xf32>
    %122 = vector.shape_cast %121 : vector<8xf32> to vector<1x8xf32>
    %123 = tpu.reciprocal %122 {approx = true} : vector<1x8xf32> -> vector<1x8xf32>
    %124 = vector.broadcast %123 : vector<1x8xf32> to vector<8x8xf32>
    %125 = arith.mulf %120, %124 : vector<8x8xf32>
    %126 = arith.truncf %125 : vector<8x8xf32> to vector<8x8xbf16>
    %cst_57 = arith.constant dense<0.000000e+00> : vector<8x32xf32>
    %127 = tpu.matmul %126, %114, %cst_57 {dimension_numbers = #tpu.dot_dimension_numbers<[1], [0], [0], [1], [0, 0, 1, 1], [], []>} : vector<8x8xbf16>, vector<8x32xbf16>, vector<8x32xf32> -> vector<8x32xf32>
    %128 = arith.addf %127, %113 : vector<8x32xf32>
    %cst_58 = arith.constant dense<0.000000e+00> : vector<32xf32>
    %129 = vector.multi_reduction <add>, %128, %cst_58 [0] : vector<8x32xf32> to vector<32xf32>
    %130 = vector.shape_cast %129 : vector<32xf32> to vector<1x32xf32>
    %cst_59 = arith.constant 1.250000e-01 : f32
    %131 = vector.broadcast %cst_59 : f32 to vector<1x32xf32>
    %132 = arith.mulf %130, %131 : vector<1x32xf32>
    %133 = arith.truncf %132 : vector<1x32xf32> to vector<1x32xbf16>
    %cst_60 = arith.constant dense<0.000000e+00> : vector<1x32xf32>
    %134 = tpu.matmul %133, %15, %cst_60 {dimension_numbers = #tpu.dot_dimension_numbers<[1], [0], [0], [1], [0, 0, 1, 1], [], []>} : vector<1x32xbf16>, vector<32x32xbf16>, vector<1x32xf32> -> vector<1x32xf32>
    %135 = arith.addf %134, %16 : vector<1x32xf32>
    %cst_61 = arith.constant 0.000000e+00 : f32
    %136 = vector.broadcast %cst_61 : f32 to vector<1x32xf32>
    %137 = arith.maximumf %135, %136 : vector<1x32xf32>
    %138 = arith.truncf %137 : vector<1x32xf32> to vector<1x32xbf16>
    %cst_62 = arith.constant dense<0.000000e+00> : vector<1x32xf32>
    %139 = tpu.matmul %138, %18, %cst_62 {dimension_numbers = #tpu.dot_dimension_numbers<[1], [0], [0], [1], [0, 0, 1, 1], [], []>} : vector<1x32xbf16>, vector<32x32xbf16>, vector<1x32xf32> -> vector<1x32xf32>
    %140 = arith.addf %139, %19 : vector<1x32xf32>
    %cst_63 = arith.constant 0.000000e+00 : f32
    %141 = vector.broadcast %cst_63 : f32 to vector<1x32xf32>
    %142 = arith.maximumf %140, %141 : vector<1x32xf32>
    %143 = arith.truncf %142 : vector<1x32xf32> to vector<1x32xbf16>
    %cst_64 = arith.constant dense<0.000000e+00> : vector<1x128xf32>
    %144 = tpu.matmul %143, %21, %cst_64 {dimension_numbers = #tpu.dot_dimension_numbers<[1], [0], [0], [1], [0, 0, 1, 1], [], []>} : vector<1x32xbf16>, vector<32x128xbf16>, vector<1x128xf32> -> vector<1x128xf32>
    %145 = arith.addf %144, %22 : vector<1x128xf32>
    %c0_65 = arith.constant 0 : index
    %c0_66 = arith.constant 0 : index
    %c0_67 = arith.constant 0 : index
    %146 = vector.load %arg7[%c0_65, %c0_66, %c0_67] : memref<1x1x128xf32, #tpu.memory_space<vmem>>, vector<1x1x128xf32>
    %147 = vector.shape_cast %146 : vector<1x1x128xf32> to vector<1x128xf32>
    %148 = vector.shape_cast %145 : vector<1x128xf32> to vector<1x1x128xf32>
    tpu.vector_store %arg7[%c0_65, %c0_66, %c0_67], %148 {strides = array<i32>} : memref<1x1x128xf32, #tpu.memory_space<vmem>>, vector<1x1x128xf32>,
    return
  }
  func.func @transform_0(%arg0: i32) -> (i32, i32, i32) {
    %c0_i32 = arith.constant 0 : i32
    %c0_i32_0 = arith.constant 0 : i32
    %c0_i32_1 = arith.constant 0 : i32
    return %arg0, %c0_i32, %c0_i32_0 : i32, i32, i32
  }
  func.func @transform_1(%arg0: i32) -> (i32, i32, i32) {
    %c0_i32 = arith.constant 0 : i32
    %c0_i32_0 = arith.constant 0 : i32
    %c0_i32_1 = arith.constant 0 : i32
    return %arg0, %c0_i32, %c0_i32_0 : i32, i32, i32
  }
  func.func @transform_2(%arg0: i32) -> (i32, i32, i32) {
    %c0_i32 = arith.constant 0 : i32
    %c0_i32_0 = arith.constant 0 : i32
    %c0_i32_1 = arith.constant 0 : i32
    return %arg0, %c0_i32, %c0_i32_0 : i32, i32, i32
  }
  func.func @transform_3(%arg0: i32) -> (i32, i32, i32) {
    %c0_i32 = arith.constant 0 : i32
    %c0_i32_0 = arith.constant 0 : i32
    %c0_i32_1 = arith.constant 0 : i32
    return %arg0, %c0_i32, %c0_i32_0 : i32, i32, i32
  }
  func.func @transform_4(%arg0: i32) -> (i32, i32) {
    %c0_i32 = arith.constant 0 : i32
    %c0_i32_0 = arith.constant 0 : i32
    %c0_i32_1 = arith.constant 0 : i32
    return %c0_i32, %c0_i32_0 : i32, i32
  }
  func.func @transform_5(%arg0: i32) -> (i32, i32) {
    %c0_i32 = arith.constant 0 : i32
    %c0_i32_0 = arith.constant 0 : i32
    %c0_i32_1 = arith.constant 0 : i32
    return %c0_i32, %c0_i32_0 : i32, i32
  }
  func.func @transform_6(%arg0: i32) -> (i32, i32, i32) {
    %c0_i32 = arith.constant 0 : i32
    %c0_i32_0 = arith.constant 0 : i32
    %c0_i32_1 = arith.constant 0 : i32
    return %arg0, %c0_i32, %c0_i32_0 : i32, i32, i32
  }
}

</mosaic_0001>

<llo_original>
// kernel: sampn_forward.1
$region0: #{sampn_forward.1}
  #allocation0 [shape = 'u32[]', space=smem, size = 0x4, offset = 0x4, fixed_abs, tag = 'smem constant byte address 0x4 - core index']
  #allocation1 [shape = 'u32[72,128]{1,0:T(1,128)}', space=vmem, size = 0x9000, scoped, tag = 'internal scratch']
  %s0 = inlined_call_operand.vmem [shape: bf16[8,16,8], index: 0, kind: input, shape index: {}]
  %s1 = inlined_call_operand.vmem [shape: bf16[8,8,16], index: 1, kind: input, shape index: {}]
  %s2 = inlined_call_operand.vmem [shape: f32[8,8,16], index: 2, kind: input, shape index: {}]
  %s3 = inlined_call_operand.vmem [shape: f32[8,16,8], index: 3, kind: input, shape index: {}]
  %s4 = inlined_call_operand.vmem [shape: f32[216,32], index: 4, kind: input, shape index: {}]
  %s5 = inlined_call_operand.vmem [shape: f32[40,128], index: 5, kind: input, shape index: {}]
  %s6 = inlined_call_operand.vmem [shape: f32[8,1,128], index: 6, kind: output, shape index: {}]
  %s7 = sld [smem:[#allocation0]]
  $region57: #{sampn_forward.1} parent=0
    _
  %s9 = ssub.s32 1, %s7
  %s10 = scalar_select 0, %s9, %s7
  loop: start=0, step=1, limit=10
  $region2: #{sampn_forward.1} parent=0 // loop_pre_header
    _
  $region3: #{sampn_forward.1} parent=0 // loop_header
    %s12 = sphi 0, %s16
    %p13 = scmp.ge.s32.totalorder %s12, 10
    %s22 = sphi 0, %s24
    %s25 = sphi 0, %s22
    %s26 = sphi 0, %s25
    %s42 = sphi 0, %s26
    %s48 = sphi 0, %s50
    %s51 = sphi 0, %s48
    %s52 = sphi 0, %s51
    %s68 = sphi 0, %s52
    %s74 = sphi 0, %s76
    %s77 = sphi 0, %s74
    %s78 = sphi 0, %s77
    %s94 = sphi 0, %s78
    %s100 = sphi 0, %s102
    %s103 = sphi 0, %s100
    %s104 = sphi 0, %s103
    %s120 = sphi 0, %s104
    %s124 = sphi 0, %s124
    %s126 = sphi 0, %s124
    %s127 = sphi 0, %s126
    %s141 = sphi 0, %s127
    %s145 = sphi 0, %s145
    %s147 = sphi 0, %s145
    %s148 = sphi 0, %s147
    %s162 = sphi 0, %s148
    %s168 = sphi 0, %s170
    %s171 = sphi 0, %s168
    %s172 = sphi 0, %s171
    %s188 = sphi 0, %s172
  $region4: #{sampn_forward.1} parent=0 // loop_header_branch
    %15 = sbr.rel (%p13) target = $region8
  $region5: #{sampn_forward.1} parent=0 // loop_body
    %s17 = ssub.s32 %s12, 1
    %s18 = ssub.s32 %s12, 2
    %s19 = sadd.s32 %s12, 1
    %s20 = ssub.s32 %s12, %s19
    %p21 = scmp.eq.s32.totalorder %s20, 0
    %s23 = sadd.s32 %s22, 1
    %s24 = scalar_select %p21, %s22, %s23
    %p27 = pneg %p21
    %p28 = scmp.eq.s32.totalorder %s12, 7
    %p29 = por %p27, %p28
    %p30 = scmp.ne.s32.totalorder %s22, %s25
    %p31 = scmp.eq.s32.totalorder %s12, 0
    %p32 = por %p30, %p31
    %p33 = scmp.ne.s32.totalorder %s22, %s25
    %p34 = scmp.eq.s32.totalorder %s17, 7
    %p35 = por %p33, %p34
    %p36 = scmp.ne.s32.totalorder %s25, %s26
    %p37 = scmp.eq.s32.totalorder %s17, 0
    %p38 = por %p36, %p37
    %p39 = scmp.ne.s32.totalorder %s25, %s26
    %p40 = scmp.eq.s32.totalorder %s18, 7
    %p41 = por %p39, %p40
    %p43 = scmp.ne.s32.totalorder %s26, %s42
    %p44 = scmp.eq.s32.totalorder %s18, 0
    %p45 = por %p43, %p44
    %s46 = ssub.s32 %s12, %s19
    %p47 = scmp.eq.s32.totalorder %s46, 0
    %s49 = sadd.s32 %s48, 1
    %s50 = scalar_select %p47, %s48, %s49
    %p53 = pneg %p47
    %p54 = scmp.eq.s32.totalorder %s12, 7
    %p55 = por %p53, %p54
    %p56 = scmp.ne.s32.totalorder %s48, %s51
    %p57 = scmp.eq.s32.totalorder %s12, 0
    %p58 = por %p56, %p57
    %p59 = scmp.ne.s32.totalorder %s48, %s51
    %p60 = scmp.eq.s32.totalorder %s17, 7
    %p61 = por %p59, %p60
    %p62 = scmp.ne.s32.totalorder %s51, %s52
    %p63 = scmp.eq.s32.totalorder %s17, 0
    %p64 = por %p62, %p63
    %p65 = scmp.ne.s32.totalorder %s51, %s52
    %p66 = scmp.eq.s32.totalorder %s18, 7
    %p67 = por %p65, %p66
    %p69 = scmp.ne.s32.totalorder %s52, %s68
    %p70 = scmp.eq.s32.totalorder %s18, 0
    %p71 = por %p69, %p70
    %s72 = ssub.s32 %s12, %s19
    %p73 = scmp.eq.s32.totalorder %s72, 0
    %s75 = sadd.s32 %s74, 1
    %s76 = scalar_select %p73, %s74, %s75
    %p79 = pneg %p73
    %p80 = scmp.eq.s32.totalorder %s12, 7
    %p81 = por %p79, %p80
    %p82 = scmp.ne.s32.totalorder %s74, %s77
    %p83 = scmp.eq.s32.totalorder %s12, 0
    %p84 = por %p82, %p83
    %p85 = scmp.ne.s32.totalorder %s74, %s77
    %p86 = scmp.eq.s32.totalorder %s17, 7
    %p87 = por %p85, %p86
    %p88 = scmp.ne.s32.totalorder %s77, %s78
    %p89 = scmp.eq.s32.totalorder %s17, 0
    %p90 = por %p88, %p89
    %p91 = scmp.ne.s32.totalorder %s77, %s78
    %p92 = scmp.eq.s32.totalorder %s18, 7
    %p93 = por %p91, %p92
    %p95 = scmp.ne.s32.totalorder %s78, %s94
    %p96 = scmp.eq.s32.totalorder %s18, 0
    %p97 = por %p95, %p96
    %s98 = ssub.s32 %s12, %s19
    %p99 = scmp.eq.s32.totalorder %s98, 0
    %s101 = sadd.s32 %s100, 1
    %s102 = scalar_select %p99, %s100, %s101
    %p105 = pneg %p99
    %p106 = scmp.eq.s32.totalorder %s12, 7
    %p107 = por %p105, %p106
    %p108 = scmp.ne.s32.totalorder %s100, %s103
    %p109 = scmp.eq.s32.totalorder %s12, 0
    %p110 = por %p108, %p109
    %p111 = scmp.ne.s32.totalorder %s100, %s103
    %p112 = scmp.eq.s32.totalorder %s17, 7
    %p113 = por %p111, %p112
    %p114 = scmp.ne.s32.totalorder %s103, %s104
    %p115 = scmp.eq.s32.totalorder %s17, 0
    %p116 = por %p114, %p115
    %p117 = scmp.ne.s32.totalorder %s103, %s104
    %p118 = scmp.eq.s32.totalorder %s18, 7
    %p119 = por %p117, %p118
    %p121 = scmp.ne.s32.totalorder %s104, %s120
    %p122 = scmp.eq.s32.totalorder %s18, 0
    %p123 = por %p121, %p122
    %s125 = sadd.s32 %s124, 1
    %p128 = scmp.eq.s32.totalorder %s12, 7
    %p129 = scmp.ne.s32.totalorder %s124, %s126
    %p130 = scmp.eq.s32.totalorder %s12, 0
    %p131 = por %p129, %p130
    %p132 = scmp.ne.s32.totalorder %s124, %s126
    %p133 = scmp.eq.s32.totalorder %s17, 7
    %p134 = por %p132, %p133
    %p135 = scmp.ne.s32.totalorder %s126, %s127
    %p136 = scmp.eq.s32.totalorder %s17, 0
    %p137 = por %p135, %p136
    %p138 = scmp.ne.s32.totalorder %s126, %s127
    %p139 = scmp.eq.s32.totalorder %s18, 7
    %p140 = por %p138, %p139
    %p142 = scmp.ne.s32.totalorder %s127, %s141
    %p143 = scmp.eq.s32.totalorder %s18, 0
    %p144 = por %p142, %p143
    %s146 = sadd.s32 %s145, 1
    %p149 = scmp.eq.s32.totalorder %s12, 7
    %p150 = scmp.ne.s32.totalorder %s145, %s147
    %p151 = scmp.eq.s32.totalorder %s12, 0
    %p152 = por %p150, %p151
    %p153 = scmp.ne.s32.totalorder %s145, %s147
    %p154 = scmp.eq.s32.totalorder %s17, 7
    %p155 = por %p153, %p154
    %p156 = scmp.ne.s32.totalorder %s147, %s148
    %p157 = scmp.eq.s32.totalorder %s17, 0
    %p158 = por %p156, %p157
    %p159 = scmp.ne.s32.totalorder %s147, %s148
    %p160 = scmp.eq.s32.totalorder %s18, 7
    %p161 = por %p159, %p160
    %p163 = scmp.ne.s32.totalorder %s148, %s162
    %p164 = scmp.eq.s32.totalorder %s18, 0
    %p165 = por %p163, %p164
    %s166 = ssub.s32 %s12, %s19
    %p167 = scmp.eq.s32.totalorder %s166, 0
    %s169 = sadd.s32 %s168, 1
    %s170 = scalar_select %p167, %s168, %s169
    %p173 = pneg %p167
    %p174 = scmp.eq.s32.totalorder %s12, 7
    %p175 = por %p173, %p174
    %p176 = scmp.ne.s32.totalorder %s168, %s171
    %p177 = scmp.eq.s32.totalorder %s12, 0
    %p178 = por %p176, %p177
    %p179 = scmp.ne.s32.totalorder %s168, %s171
    %p180 = scmp.eq.s32.totalorder %s17, 7
    %p181 = por %p179, %p180
    %p182 = scmp.ne.s32.totalorder %s171, %s172
    %p183 = scmp.eq.s32.totalorder %s17, 0
    %p184 = por %p182, %p183
    %p185 = scmp.ne.s32.totalorder %s171, %s172
    %p186 = scmp.eq.s32.totalorder %s18, 7
    %p187 = por %p185, %p186
    %p189 = scmp.ne.s32.totalorder %s172, %s188
    %p190 = scmp.eq.s32.totalorder %s18, 0
    %p191 = por %p189, %p190
    %p192 = scmp.le.s32.totalorder 1, %s12
    %p193 = scmp.lt.s32.totalorder %s12, 9
    %p194 = pnand %p192, %p193
    %p195 = pneg %p194
    // Predicated region
    $region9: #{sampn_forward.1} parent=5 // pred_check
      _
    $region10: #{sampn_forward.1} parent=5 // pred_check_branch
      %197 = sbr.rel (%p194) target = $region12
    $region11: #{sampn_forward.1} parent=5 // pred_region
      %s198 = ssub.s32 %s12, 1
      // Predicated region
      $region13: #{sampn_forward.1} parent=11 // pred_check
        %p199 = pneg %p137
      $region14: #{sampn_forward.1} parent=11 // pred_check_branch
        %201 = sbr.rel (%p199) target = $region16
      $region15: #{sampn_forward.1} parent=11 // pred_region
        _
      $region16: #{sampn_forward.1} parent=11 // pred_fallthru
        _
      // Predicated region
      $region17: #{sampn_forward.1} parent=11 // pred_check
        %p202 = pneg %p158
      $region18: #{sampn_forward.1} parent=11 // pred_check_branch
        %204 = sbr.rel (%p202) target = $region20
      $region19: #{sampn_forward.1} parent=11 // pred_region
        _
      $region20: #{sampn_forward.1} parent=11 // pred_fallthru
        _
    $region12: #{sampn_forward.1} parent=5 // pred_fallthru
      _
    %p205 = scmp.lt.s32.totalorder %s12, 8
    // Predicated region
    $region21: #{sampn_forward.1} parent=5 // pred_check
      %p206 = pneg %p205
    $region22: #{sampn_forward.1} parent=5 // pred_check_branch
      %208 = sbr.rel (%p206) target = $region24
    $region23: #{sampn_forward.1} parent=5 // pred_region
      // Predicated region
      $region25: #{sampn_forward.1} parent=23 // pred_check
        %p209 = pneg %p32
      $region26: #{sampn_forward.1} parent=23 // pred_check_branch
        %211 = sbr.rel (%p209) target = $region28
      $region27: #{sampn_forward.1} parent=23 // pred_region
        %p212 = scmp.lt.s32.totalorder %s12, 7
        %s213 = scalar_select %p212, %s12, 7
        %s214 = smul.addr %s213, 2
        %s215 = smul.addr %s214, 4
        %s216 = scalar_lea.vmem %s0, %s215
      $region28: #{sampn_forward.1} parent=23 // pred_fallthru
        _
      // Predicated region
      $region29: #{sampn_forward.1} parent=23 // pred_check
        %p217 = pneg %p58
      $region30: #{sampn_forward.1} parent=23 // pred_check_branch
        %219 = sbr.rel (%p217) target = $region32
      $region31: #{sampn_forward.1} parent=23 // pred_region
        %p220 = scmp.lt.s32.totalorder %s12, 7
        %s221 = scalar_select %p220, %s12, 7
        %s222 = smul.addr %s221, 4
        %s223 = scalar_lea.vmem %s1, %s222
      $region32: #{sampn_forward.1} parent=23 // pred_fallthru
        _
      // Predicated region
      $region33: #{sampn_forward.1} parent=23 // pred_check
        %p224 = pneg %p84
      $region34: #{sampn_forward.1} parent=23 // pred_check_branch
        %226 = sbr.rel (%p224) target = $region36
      $region35: #{sampn_forward.1} parent=23 // pred_region
        %p227 = scmp.lt.s32.totalorder %s12, 7
        %s228 = scalar_select %p227, %s12, 7
        %s229 = smul.addr %s228, 8
        %s230 = scalar_lea.vmem %s2, %s229
      $region36: #{sampn_forward.1} parent=23 // pred_fallthru
        _
      // Predicated region
      $region37: #{sampn_forward.1} parent=23 // pred_check
        %p231 = pneg %p110
      $region38: #{sampn_forward.1} parent=23 // pred_check_branch
        %233 = sbr.rel (%p231) target = $region40
      $region39: #{sampn_forward.1} parent=23 // pred_region
        %p234 = scmp.lt.s32.totalorder %s12, 7
        %s235 = scalar_select %p234, %s12, 7
        %s236 = smul.addr %s235, 2
        %s237 = smul.addr %s236, 8
        %s238 = scalar_lea.vmem %s3, %s237
      $region40: #{sampn_forward.1} parent=23 // pred_fallthru
        _
    $region24: #{sampn_forward.1} parent=5 // pred_fallthru
      _
    %p239 = scmp.le.s32.totalorder 1, %s12
    %p240 = scmp.lt.s32.totalorder %s12, 9
    %p241 = pnand %p239, %p240
    %p242 = pneg %p241
    // Predicated region
    $region41: #{sampn_forward.1} parent=5 // pred_check
      _
    $region42: #{sampn_forward.1} parent=5 // pred_check_branch
      %244 = sbr.rel (%p241) target = $region44
    $region43: #{sampn_forward.1} parent=5 // pred_region
      %s245 = ssub.s32 %s12, 1
      %p246 = scmp.lt.s32.totalorder %s17, 7
      %s247 = scalar_select %p246, %s17, 7
      %s248 = smul.addr %s247, 2
      %s249 = smul.addr %s248, 4
      %s250 = scalar_lea.vmem %s0, %s249
      %p251 = pneg %p38
      %p252 = pneg %p35
      %p253 = scmp.lt.s32.totalorder %s17, 7
      %s254 = scalar_select %p253, %s17, 7
      %s255 = smul.addr %s254, 4
      %s256 = scalar_lea.vmem %s1, %s255
      %p257 = pneg %p64
      %p258 = pneg %p61
      %p259 = scmp.lt.s32.totalorder %s17, 7
      %s260 = scalar_select %p259, %s17, 7
      %s261 = smul.addr %s260, 8
      %s262 = scalar_lea.vmem %s2, %s261
      %p263 = pneg %p90
      %p264 = pneg %p87
      %p265 = scmp.lt.s32.totalorder %s17, 7
      %s266 = scalar_select %p265, %s17, 7
      %s267 = smul.addr %s266, 2
      %s268 = smul.addr %s267, 8
      %s269 = scalar_lea.vmem %s3, %s268
      %p270 = pneg %p116
      %p271 = pneg %p113
      %p272 = pneg %p137
      %p273 = pneg %p134
      %p274 = pneg %p158
      %p275 = pneg %p155
      %p276 = pneg %p184
      %p277 = pneg %p181
      %p278 = scmp.lt.s32.totalorder %s17, 7
      %s279 = scalar_select %p278, %s17, 7
      %s280 = scalar_lea.vmem %s6, %s279
      %p281 = scmp.lt.s32.totalorder %s17, 7
      %s282 = scalar_select %p281, %s17, 7
      %s283 = smul.addr %s282, 2
      %s284 = smul.addr %s283, 4
      %s285 = scalar_lea.vmem %s0, %s284
      %p286 = scmp.lt.s32.totalorder %s17, 7
      %s287 = scalar_select %p286, %s17, 7
      %s288 = smul.addr %s287, 4
      %s289 = scalar_lea.vmem %s1, %s288
      %p290 = scmp.lt.s32.totalorder %s17, 7
      %s291 = scalar_select %p290, %s17, 7
      %s292 = smul.addr %s291, 8
      %s293 = scalar_lea.vmem %s2, %s292
      %p294 = scmp.lt.s32.totalorder %s17, 7
      %s295 = scalar_select %p294, %s17, 7
      %s296 = smul.addr %s295, 2
      %s297 = smul.addr %s296, 8
      %s298 = scalar_lea.vmem %s3, %s297
      %p299 = scmp.lt.s32.totalorder %s17, 7
      %s300 = scalar_select %p299, %s17, 7
      %s301 = scalar_lea.vmem %s6, %s300
      %v303 = vld [vmem:[%s4] sm:$0xff]
      %v304 = vld [vmem:[%s4 + $0x8] sm:$0xff]
      %v305 = vpack.c.bf16 %v304, %v303
      %v306 = vld [vmem:[%s4 + $0x10] sm:$0xff]
      %v307 = vpack.c.bf16 %v306, %v306
      %v308 = vld [vmem:[%s4 + $0x18] sm:$0x1]
      %v309 = vld [vmem:[%s4 + $0x20] sm:$0xff]
      %v310 = vld [vmem:[%s4 + $0x28] sm:$0xff]
      %v311 = vld [vmem:[%s4 + $0x30] sm:$0xff]
      %v312 = vld [vmem:[%s4 + $0x38] sm:$0xff]
      %v313 = vpack.c.bf16 %v310, %v309
      %v314 = vpack.c.bf16 %v312, %v311
      %v315 = vld [vmem:[%s4 + $0x40] sm:$0x1]
      %v316 = vld [vmem:[%s4 + $0x48] sm:$0xff]
      %v317 = vld [vmem:[%s4 + $0x50] sm:$0xff]
      %v318 = vpack.c.bf16 %v317, %v316
      %v319 = vld [vmem:[%s4 + $0x58] sm:$0x1]
      %v320 = vld [vmem:[%s4 + $0x60] sm:$0xff]
      %v321 = vld [vmem:[%s4 + $0x68] sm:$0xff]
      %v322 = vld [vmem:[%s4 + $0x70] sm:$0xff]
      %v323 = vld [vmem:[%s4 + $0x78] sm:$0xff]
      %v324 = vpack.c.bf16 %v321, %v320
      %v325 = vpack.c.bf16 %v323, %v322
      %v326 = vld [vmem:[%s4 + $0x80] sm:$0x1]
      %v327 = vld [vmem:[%s4 + $0x88] sm:$0xff]
      %v328 = vld [vmem:[%s4 + $0x90] sm:$0xff]
      %v329 = vld [vmem:[%s4 + $0x98] sm:$0xff]
      %v330 = vld [vmem:[%s4 + $0xa0] sm:$0xff]
      %v331 = vpack.c.bf16 %v328, %v327
      %v332 = vpack.c.bf16 %v330, %v329
      %v333 = vld [vmem:[%s4 + $0xa8] sm:$0x1]
      %v334 = vld [vmem:[%s4 + $0xb0] sm:$0xff]
      %v335 = vld [vmem:[%s4 + $0xb8] sm:$0xff]
      %v336 = vld [vmem:[%s4 + $0xc0] sm:$0xff]
      %v337 = vld [vmem:[%s4 + $0xc8] sm:$0xff]
      %v338 = vpack.c.bf16 %v335, %v334
      %v339 = vpack.c.bf16 %v337, %v336
      %v340 = vld [vmem:[%s4 + $0xd0] sm:$0x1]
      %v341 = vld [vmem:[%s5] sm:$0xff]
      %v342 = vld [vmem:[%s5 + $0x8] sm:$0xff]
      %v343 = vld [vmem:[%s5 + $0x10] sm:$0xff]
      %v344 = vld [vmem:[%s5 + $0x18] sm:$0xff]
      %v345 = vpack.c.bf16 %v342, %v341
      %v346 = vpack.c.bf16 %v344, %v343
      %v347 = vld [vmem:[%s5 + $0x20] sm:$0x1]
      %v348 = vld [vmem:[%s285] sm:$0xf]
      %v349 = vld [vmem:[%s285 + $0x4] sm:$0xf]
      %v350 = vld [vmem:[%s289] sm:$0xf]
      %v351 = vld [vmem:[%s293] sm:$0xff]
      %v352 = vpack.c.bf16 %v351, %v351
      %v353 = vld [vmem:[%s298] sm:$0xff]
      %v354 = vld [vmem:[%s298 + $0x8] sm:$0xff]
      %v355 = vpack.c.bf16 %v354, %v353
      %v358 = vunpack.c.l.b16 %v348
      %v359 = vunpack.c.l.b16 %v349
      %v360 = vpack.c.b16 %v359, %v358
      %vm361 = vcmask 64512
      %v363 = vsel %vm361, %v360, 0
      %vm365 = vcmask 1043456
      %v367 = vsel %vm365, %v352, 0
      %369 = vmatpush.bf16.msra.mxu0 0
      %370 = vmatpush.bf16.msra.mxu0 0
      %371 = vmatpush.bf16.msra.mxu0 0
      %372 = vmatpush.bf16.msra.mxu0 0
      %373 = vmatpush.bf16.msra.mxu0 0
      %374 = vmatpush.bf16.msra.mxu0 0
      %375 = vmatpush.bf16.msra.mxu0 0
      %376 = vmatpush.bf16.msra.mxu0 %v367
      %377 = vmatmul.bf16.gmra.mxu0 %v363
      %v378 = vpop.f32.mrf.mxu0
      %v379 = vadd.f32 0.0, %v378
      %v380 = vpop.f32.mrf.mxu0
      %v381 = vadd.f32 0.0, %v380
      %382 = vdwg.mxu0
      %v383 = vpack.c.bf16 %v381, %v379
      %v385 = vsel %vm361, %v355, 0
      %v388 = vsel %vm365, %v307, 0
      %390 = vmatpush.bf16.msra.mxu0 0
      %391 = vmatpush.bf16.msra.mxu0 0
      %392 = vmatpush.bf16.msra.mxu0 0
      %393 = vmatpush.bf16.msra.mxu0 0
      %394 = vmatpush.bf16.msra.mxu0 0
      %395 = vmatpush.bf16.msra.mxu0 0
      %396 = vmatpush.bf16.msra.mxu0 0
      %397 = vmatpush.bf16.msra.mxu0 %v388
      %398 = vmatmul.bf16.gmra.mxu0 %v385
      %v399 = vpop.f32.mrf.mxu0
      %v400 = vadd.f32 0.0, %v399
      %v401 = vpop.f32.mrf.mxu0
      %v402 = vadd.f32 0.0, %v401
      %403 = vdwg.mxu0
      %vm404 = vcmask 130048
      %v406 = vsel %vm404, %v383, 0
      %408 = vmatpush.bf16.msra.mxu0 0
      %409 = vmatpush.bf16.msra.mxu0 0
      %410 = vmatpush.bf16.msra.mxu0 0
      %411 = vmatpush.bf16.msra.mxu0 0
      %412 = vmatpush.bf16.msra.mxu0 0
      %413 = vmatpush.bf16.msra.mxu0 0
      %414 = vmatpush.bf16.msra.mxu0 0
      %415 = vmatpush.bf16.msra.mxu0 %v305
      %416 = vmatmul.bf16.gmra.mxu0 %v406
      %v417 = vpop.f32.mrf.mxu0
      %v418 = vadd.f32 %v400, %v417
      %v419 = vpop.f32.mrf.mxu0
      %v420 = vadd.f32 %v402, %v419
      %421 = vdwg.mxu0
      %v422 = vperm.slane %v308, 0
      %v423 = vadd.f32 %v418, %v422
      %v424 = vadd.f32 %v420, %v422
      %v425 = vmax.f32 %v423, 0.0
      %v426 = vmax.f32 %v424, 0.0
      %v427 = vpack.c.bf16 %v426, %v425
      %v429 = vsel %vm404, %v350, 0
      %431 = vmatpush.bf16.msra.mxu0 0
      %432 = vmatpush.bf16.msra.mxu0 0
      %433 = vmatpush.bf16.msra.mxu0 0
      %434 = vmatpush.bf16.msra.mxu0 0
      %435 = vmatpush.bf16.msra.mxu0 0
      %436 = vmatpush.bf16.msra.mxu0 0
      %437 = vmatpush.bf16.msra.mxu0 0
      %438 = vmatpush.bf16.msra.mxu0 %v427
      %439 = vmatmul.bf16.gmra.mxu0 %v429
      %v440 = vpop.f32.mrf.mxu0
      %v441 = vadd.f32 0.0, %v440
      %v442 = vpop.f32.mrf.mxu0
      %443 = vdwg.mxu0
      %v444 = vpack.c.bf16 %v441, %v441
      %v446 = vsel %vm365, %v444, 0
      %448 = vmatpush.bf16.msra.mxu0 0
      %449 = vmatpush.bf16.msra.mxu0 0
      %450 = vmatpush.bf16.msra.mxu0 0
      %451 = vmatpush.bf16.msra.mxu0 0
      %452 = vmatpush.bf16.msra.mxu0 0
      %453 = vmatpush.bf16.msra.mxu0 0
      %454 = vmatpush.bf16.msra.mxu0 0
      %455 = vmatpush.bf16.msra.mxu0 %v446
      %456 = vmatmul.bf16.gmra.mxu0 %v363
      %v457 = vpop.f32.mrf.mxu0
      %v458 = vadd.f32 0.0, %v457
      %v459 = vpop.f32.mrf.mxu0
      %v460 = vadd.f32 0.0, %v459
      %461 = vdwg.mxu0
      %v462 = vsub.f32 %v458, %v425
      %v463 = vsub.f32 %v460, %v426
      %v464 = vpack.c.bf16 %v463, %v462
      %vm465 = vcmask 261120
      %v467 = vsel %vm465, %v464, 0
      %469 = vmatpush.bf16.msra.mxu0 0
      %470 = vmatpush.bf16.msra.mxu0 0
      %471 = vmatpush.bf16.msra.mxu0 0
      %472 = vmatpush.bf16.msra.mxu0 0
      %473 = vmatpush.bf16.msra.mxu0 0
      %474 = vmatpush.bf16.msra.mxu0 0
      %475 = vmatpush.bf16.msra.mxu0 %v314
      %476 = vmatpush.bf16.msra.mxu0 %v313
      %477 = vmatmul.bf16.gmra.mxu0 %v467
      %v478 = vpop.f32.mrf.mxu0
      %v479 = vadd.f32 0.0, %v478
      %v480 = vpop.f32.mrf.mxu0
      %v481 = vadd.f32 0.0, %v480
      %482 = vdwg.mxu0
      %v483 = vadd.f32 %v423, %v479
      %v484 = vadd.f32 %v424, %v481
      %v485 = vperm.slane %v315, 0
      %v486 = vadd.f32 %v483, %v485
      %v487 = vadd.f32 %v484, %v485
      %v488 = vpack.c.bf16 %v487, %v486
      %489 = vmatpush.bf16.msra.mxu0 0
      %490 = vmatpush.bf16.msra.mxu0 0
      %491 = vmatpush.bf16.msra.mxu0 0
      %492 = vmatpush.bf16.msra.mxu0 0
      %493 = vmatpush.bf16.msra.mxu0 0
      %494 = vmatpush.bf16.msra.mxu0 0
      %495 = vmatpush.bf16.msra.mxu0 0
      %496 = vmatpush.bf16.msra.mxu0 %v488
      %497 = vmatmul.bf16.gmra.mxu0 %v429
      %v498 = vpop.f32.mrf.mxu0
      %v499 = vadd.f32 0.0, %v498
      %v500 = vpop.f32.mrf.mxu0
      %501 = vdwg.mxu0
      %v502 = vpack.c.bf16 %v499, %v499
      %v504 = vsel %vm365, %v502, 0
      %506 = vmatpush.bf16.msra.mxu0 0
      %507 = vmatpush.bf16.msra.mxu0 0
      %508 = vmatpush.bf16.msra.mxu0 0
      %509 = vmatpush.bf16.msra.mxu0 0
      %510 = vmatpush.bf16.msra.mxu0 0
      %511 = vmatpush.bf16.msra.mxu0 0
      %512 = vmatpush.bf16.msra.mxu0 0
      %513 = vmatpush.bf16.msra.mxu0 %v504
      %514 = vmatmul.bf16.gmra.mxu0 %v363
      %v515 = vpop.f32.mrf.mxu0
      %v516 = vadd.f32 0.0, %v515
      %v517 = vpop.f32.mrf.mxu0
      %v518 = vadd.f32 0.0, %v517
      %519 = vdwg.mxu0
      %v520 = vsub.f32 %v516, %v486
      %v521 = vsub.f32 %v518, %v487
      %v522 = vpack.c.bf16 %v521, %v520
      %v524 = vsel %vm465, %v522, 0
      %526 = vmatpush.bf16.msra.mxu0 0
      %527 = vmatpush.bf16.msra.mxu0 0
      %528 = vmatpush.bf16.msra.mxu0 0
      %529 = vmatpush.bf16.msra.mxu0 0
      %530 = vmatpush.bf16.msra.mxu0 0
      %531 = vmatpush.bf16.msra.mxu0 0
      %532 = vmatpush.bf16.msra.mxu0 %v314
      %533 = vmatpush.bf16.msra.mxu0 %v313
      %534 = vmatmul.bf16.gmra.mxu0 %v524
      %v535 = vpop.f32.mrf.mxu0
      %v536 = vadd.f32 0.0, %v535
      %v537 = vpop.f32.mrf.mxu0
      %v538 = vadd.f32 0.0, %v537
      %539 = vdwg.mxu0
      %v540 = vadd.f32 %v423, %v536
      %v541 = vadd.f32 %v424, %v538
      %v542 = vadd.f32 %v540, %v485
      %v543 = vadd.f32 %v541, %v485
      %v544 = vpack.c.bf16 %v543, %v542
      %545 = vmatpush.bf16.msra.mxu0 0
      %546 = vmatpush.bf16.msra.mxu0 0
      %547 = vmatpush.bf16.msra.mxu0 0
      %548 = vmatpush.bf16.msra.mxu0 0
      %549 = vmatpush.bf16.msra.mxu0 0
      %550 = vmatpush.bf16.msra.mxu0 0
      %551 = vmatpush.bf16.msra.mxu0 0
      %552 = vmatpush.bf16.msra.mxu0 %v544
      %553 = vmatmul.bf16.gmra.mxu0 %v429
      %v554 = vpop.f32.mrf.mxu0
      %v555 = vadd.f32 0.0, %v554
      %v556 = vpop.f32.mrf.mxu0
      %557 = vdwg.mxu0
      %v558 = vpack.c.bf16 %v555, %v555
      %v560 = vsel %vm365, %v558, 0
      %562 = vmatpush.bf16.msra.mxu0 0
      %563 = vmatpush.bf16.msra.mxu0 0
      %564 = vmatpush.bf16.msra.mxu0 0
      %565 = vmatpush.bf16.msra.mxu0 0
      %566 = vmatpush.bf16.msra.mxu0 0
      %567 = vmatpush.bf16.msra.mxu0 0
      %568 = vmatpush.bf16.msra.mxu0 0
      %569 = vmatpush.bf16.msra.mxu0 %v560
      %570 = vmatmul.bf16.gmra.mxu0 %v363
      %v571 = vpop.f32.mrf.mxu0
      %v572 = vadd.f32 0.0, %v571
      %v573 = vpop.f32.mrf.mxu0
      %v574 = vadd.f32 0.0, %v573
      %575 = vdwg.mxu0
      %v576 = vsub.f32 %v572, %v542
      %v577 = vsub.f32 %v574, %v543
      %v578 = vpack.c.bf16 %v577, %v576
      %v580 = vsel %vm465, %v578, 0
      %582 = vmatpush.bf16.msra.mxu0 0
      %583 = vmatpush.bf16.msra.mxu0 0
      %584 = vmatpush.bf16.msra.mxu0 0
      %585 = vmatpush.bf16.msra.mxu0 0
      %586 = vmatpush.bf16.msra.mxu0 0
      %587 = vmatpush.bf16.msra.mxu0 0
      %588 = vmatpush.bf16.msra.mxu0 %v314
      %589 = vmatpush.bf16.msra.mxu0 %v313
      %590 = vmatmul.bf16.gmra.mxu0 %v580
      %v591 = vpop.f32.mrf.mxu0
      %v592 = vadd.f32 0.0, %v591
      %v593 = vpop.f32.mrf.mxu0
      %v594 = vadd.f32 0.0, %v593
      %595 = vdwg.mxu0
      %v596 = vadd.f32 %v423, %v592
      %v597 = vadd.f32 %v424, %v594
      %v598 = vadd.f32 %v596, %v485
      %v599 = vadd.f32 %v597, %v485
      %v600 = vpack.c.bf16 %v599, %v598
      %601 = vmatpush.bf16.msra.mxu0 0
      %602 = vmatpush.bf16.msra.mxu0 0
      %603 = vmatpush.bf16.msra.mxu0 0
      %604 = vmatpush.bf16.msra.mxu0 0
      %605 = vmatpush.bf16.msra.mxu0 0
      %606 = vmatpush.bf16.msra.mxu0 0
      %607 = vmatpush.bf16.msra.mxu0 0
      %608 = vmatpush.bf16.msra.mxu0 %v600
      %609 = vmatmul.bf16.gmra.mxu0 %v429
      %v610 = vpop.f32.mrf.mxu0
      %v611 = vadd.f32 0.0, %v610
      %v612 = vpop.f32.mrf.mxu0
      %613 = vdwg.mxu0
      %v614 = vpack.c.bf16 %v611, %v611
      %v616 = vsel %vm365, %v614, 0
      %618 = vmatpush.bf16.msra.mxu0 0
      %619 = vmatpush.bf16.msra.mxu0 0
      %620 = vmatpush.bf16.msra.mxu0 0
      %621 = vmatpush.bf16.msra.mxu0 0
      %622 = vmatpush.bf16.msra.mxu0 0
      %623 = vmatpush.bf16.msra.mxu0 0
      %624 = vmatpush.bf16.msra.mxu0 0
      %625 = vmatpush.bf16.msra.mxu0 %v616
      %626 = vmatmul.bf16.gmra.mxu0 %v363
      %v627 = vpop.f32.mrf.mxu0
      %v628 = vadd.f32 0.0, %v627
      %v629 = vpop.f32.mrf.mxu0
      %v630 = vadd.f32 0.0, %v629
      %631 = vdwg.mxu0
      %v632 = vsub.f32 %v628, %v598
      %v633 = vsub.f32 %v630, %v599
      %v634 = vpack.c.bf16 %v633, %v632
      %v636 = vsel %vm465, %v634, 0
      %638 = vmatpush.bf16.msra.mxu0 0
      %639 = vmatpush.bf16.msra.mxu0 0
      %640 = vmatpush.bf16.msra.mxu0 0
      %641 = vmatpush.bf16.msra.mxu0 0
      %642 = vmatpush.bf16.msra.mxu0 0
      %643 = vmatpush.bf16.msra.mxu0 0
      %644 = vmatpush.bf16.msra.mxu0 %v314
      %645 = vmatpush.bf16.msra.mxu0 %v313
      %646 = vmatmul.bf16.gmra.mxu0 %v636
      %v647 = vpop.f32.mrf.mxu0
      %v648 = vadd.f32 0.0, %v647
      %v649 = vpop.f32.mrf.mxu0
      %v650 = vadd.f32 0.0, %v649
      %651 = vdwg.mxu0
      %v652 = vadd.f32 %v423, %v648
      %v653 = vadd.f32 %v424, %v650
      %v654 = vadd.f32 %v652, %v485
      %v655 = vadd.f32 %v653, %v485
      %v656 = vpack.c.bf16 %v655, %v654
      %657 = vmatpush.bf16.msra.mxu0 0
      %658 = vmatpush.bf16.msra.mxu0 0
      %659 = vmatpush.bf16.msra.mxu0 0
      %660 = vmatpush.bf16.msra.mxu0 0
      %661 = vmatpush.bf16.msra.mxu0 0
      %662 = vmatpush.bf16.msra.mxu0 0
      %663 = vmatpush.bf16.msra.mxu0 0
      %664 = vmatpush.bf16.msra.mxu0 %v656
      %665 = vmatmul.bf16.gmra.mxu0 %v429
      %v666 = vpop.f32.mrf.mxu0
      %v667 = vadd.f32 0.0, %v666
      %v668 = vpop.f32.mrf.mxu0
      %669 = vdwg.mxu0
      %v670 = vpack.c.bf16 %v667, %v667
      %v672 = vsel %vm365, %v670, 0
      %674 = vmatpush.bf16.msra.mxu0 0
      %675 = vmatpush.bf16.msra.mxu0 0
      %676 = vmatpush.bf16.msra.mxu0 0
      %677 = vmatpush.bf16.msra.mxu0 0
      %678 = vmatpush.bf16.msra.mxu0 0
      %679 = vmatpush.bf16.msra.mxu0 0
      %680 = vmatpush.bf16.msra.mxu0 0
      %681 = vmatpush.bf16.msra.mxu0 %v672
      %682 = vmatmul.bf16.gmra.mxu0 %v363
      %v683 = vpop.f32.mrf.mxu0
      %v684 = vadd.f32 0.0, %v683
      %v685 = vpop.f32.mrf.mxu0
      %v686 = vadd.f32 0.0, %v685
      %687 = vdwg.mxu0
      %v688 = vsub.f32 %v684, %v654
      %v689 = vsub.f32 %v686, %v655
      %v690 = vpack.c.bf16 %v689, %v688
      %v692 = vsel %vm465, %v690, 0
      %694 = vmatpush.bf16.msra.mxu0 0
      %695 = vmatpush.bf16.msra.mxu0 0
      %696 = vmatpush.bf16.msra.mxu0 0
      %697 = vmatpush.bf16.msra.mxu0 0
      %698 = vmatpush.bf16.msra.mxu0 0
      %699 = vmatpush.bf16.msra.mxu0 0
      %700 = vmatpush.bf16.msra.mxu0 %v314
      %701 = vmatpush.bf16.msra.mxu0 %v313
      %702 = vmatmul.bf16.gmra.mxu0 %v692
      %v703 = vpop.f32.mrf.mxu0
      %v704 = vadd.f32 0.0, %v703
      %v705 = vpop.f32.mrf.mxu0
      %v706 = vadd.f32 0.0, %v705
      %707 = vdwg.mxu0
      %v708 = vadd.f32 %v423, %v704
      %v709 = vadd.f32 %v424, %v706
      %v710 = vadd.f32 %v708, %v485
      %v711 = vadd.f32 %v709, %v485
      %v712 = vpack.c.bf16 %v711, %v710
      %713 = vmatpush.bf16.msra.mxu0 0
      %714 = vmatpush.bf16.msra.mxu0 0
      %715 = vmatpush.bf16.msra.mxu0 0
      %716 = vmatpush.bf16.msra.mxu0 0
      %717 = vmatpush.bf16.msra.mxu0 0
      %718 = vmatpush.bf16.msra.mxu0 0
      %719 = vmatpush.bf16.msra.mxu0 0
      %720 = vmatpush.bf16.msra.mxu0 %v712
      %721 = vmatmul.bf16.gmra.mxu0 %v429
      %v722 = vpop.f32.mrf.mxu0
      %v723 = vadd.f32 0.0, %v722
      %v724 = vpop.f32.mrf.mxu0
      %725 = vdwg.mxu0
      %v726 = vpack.c.bf16 %v723, %v723
      %v728 = vsel %vm365, %v726, 0
      %730 = vmatpush.bf16.msra.mxu0 0
      %731 = vmatpush.bf16.msra.mxu0 0
      %732 = vmatpush.bf16.msra.mxu0 0
      %733 = vmatpush.bf16.msra.mxu0 0
      %734 = vmatpush.bf16.msra.mxu0 0
      %735 = vmatpush.bf16.msra.mxu0 0
      %736 = vmatpush.bf16.msra.mxu0 0
      %737 = vmatpush.bf16.msra.mxu0 %v728
      %738 = vmatmul.bf16.gmra.mxu0 %v363
      %v739 = vpop.f32.mrf.mxu0
      %v740 = vadd.f32 0.0, %v739
      %v741 = vpop.f32.mrf.mxu0
      %v742 = vadd.f32 0.0, %v741
      %743 = vdwg.mxu0
      %v744 = vsub.f32 %v740, %v710
      %v745 = vsub.f32 %v742, %v711
      %v746 = vpack.c.bf16 %v745, %v744
      %v748 = vsel %vm465, %v746, 0
      %750 = vmatpush.bf16.msra.mxu0 0
      %751 = vmatpush.bf16.msra.mxu0 0
      %752 = vmatpush.bf16.msra.mxu0 0
      %753 = vmatpush.bf16.msra.mxu0 0
      %754 = vmatpush.bf16.msra.mxu0 0
      %755 = vmatpush.bf16.msra.mxu0 0
      %756 = vmatpush.bf16.msra.mxu0 %v314
      %757 = vmatpush.bf16.msra.mxu0 %v313
      %758 = vmatmul.bf16.gmra.mxu0 %v748
      %v759 = vpop.f32.mrf.mxu0
      %v760 = vadd.f32 0.0, %v759
      %v761 = vpop.f32.mrf.mxu0
      %v762 = vadd.f32 0.0, %v761
      %763 = vdwg.mxu0
      %v764 = vadd.f32 %v423, %v760
      %v765 = vadd.f32 %v424, %v762
      %v766 = vadd.f32 %v764, %v485
      %v767 = vadd.f32 %v765, %v485
      %v768 = vpack.c.bf16 %v767, %v766
      %769 = vmatpush.bf16.msra.mxu0 0
      %770 = vmatpush.bf16.msra.mxu0 0
      %771 = vmatpush.bf16.msra.mxu0 0
      %772 = vmatpush.bf16.msra.mxu0 0
      %773 = vmatpush.bf16.msra.mxu0 0
      %774 = vmatpush.bf16.msra.mxu0 0
      %775 = vmatpush.bf16.msra.mxu0 0
      %776 = vmatpush.bf16.msra.mxu0 %v768
      %777 = vmatmul.bf16.gmra.mxu0 %v429
      %v778 = vpop.f32.mrf.mxu0
      %v779 = vadd.f32 0.0, %v778
      %v780 = vpop.f32.mrf.mxu0
      %781 = vdwg.mxu0
      %v782 = vperm.slane %v319, 0
      %v783 = vsel %vm404, %v352, 0
      %785 = vmatpush.bf16.msra.mxu0 0
      %786 = vmatpush.bf16.msra.mxu0 0
      %787 = vmatpush.bf16.msra.mxu0 0
      %788 = vmatpush.bf16.msra.mxu0 0
      %789 = vmatpush.bf16.msra.mxu0 0
      %790 = vmatpush.bf16.msra.mxu0 0
      %791 = vmatpush.bf16.msra.mxu0 0
      %792 = vmatpush.bf16.msra.mxu0 %v318
      %793 = vmatmul.bf16.gmra.mxu0 %v783
      %v794 = vpop.f32.mrf.mxu0
      %v795 = vadd.f32 %v782, %v794
      %v796 = vpop.f32.mrf.mxu0
      %797 = vdwg.mxu0
      %v798 = vadd.f32 %v795, %v779
      %v799 = vpack.c.bf16 %v798, %v798
      %v800 = vperm.slane %v326, 0
      %v802 = vsel %vm465, %v799, 0
      %804 = vmatpush.bf16.msra.mxu0 0
      %805 = vmatpush.bf16.msra.mxu0 0
      %806 = vmatpush.bf16.msra.mxu0 0
      %807 = vmatpush.bf16.msra.mxu0 0
      %808 = vmatpush.bf16.msra.mxu0 0
      %809 = vmatpush.bf16.msra.mxu0 0
      %810 = vmatpush.bf16.msra.mxu0 %v325
      %811 = vmatpush.bf16.msra.mxu0 %v324
      %812 = vmatmul.bf16.gmra.mxu0 %v802
      %v813 = vpop.f32.mrf.mxu0
      %v814 = vadd.f32 %v800, %v813
      %v815 = vpop.f32.mrf.mxu0
      %816 = vdwg.mxu0
      %v817 = vmax.f32 %v814, 0.0
      %v818 = vpack.c.bf16 %v817, %v817
      %v820 = vsel %vm465, %v818, 0
      %822 = vmatpush.bf16.xpose.msra.mxu0 0
      %823 = vmatpush.bf16.xpose.msra.mxu0 0
      %824 = vmatpush.bf16.xpose.msra.mxu0 0
      %825 = vmatpush.bf16.xpose.msra.mxu0 0
      %826 = vmatpush.bf16.xpose.msra.mxu0 0
      %827 = vmatpush.bf16.xpose.msra.mxu0 0
      %828 = vmatpush.bf16.xpose.msra.mxu0 0
      %829 = vmatpush.bf16.xpose.msra.mxu0 %v820
      %830 = vmatmul.bf16.gmra.mxu0 %v820
      %v831 = vpop.f32.mrf.mxu0
      %v832 = vadd.f32 0.0, %v831
      %v833 = vpop.f32.mrf.mxu0
      %834 = vdwg.mxu0
      %v835 = vsel %vm361, %v832, -inf
      %v836 = vrot.slane %v835, 4
      %v837 = vmax.f32 %v835, %v836
      %v838 = vrot.slane %v837, 2
      %v839 = vmax.f32 %v837, %v838
      %v840 = vrot.slane %v839, 1
      %v841 = vmax.f32 %v839, %v840
      %v842 = vsub.f32 %v832, %v841
      %v843 = vmul.f32 %v842, 1.442695
      %v844 = vpow.pop %v843
      %v845 = vsel %vm361, %v844, 0.0
      %v846 = vrot.slane %v845, 4
      %v847 = vadd.f32 %v845, %v846
      %v848 = vrot.slane %v847, 2
      %v849 = vadd.f32 %v847, %v848
      %v850 = vrot.slane %v849, 1
      %v851 = vadd.f32 %v849, %v850
      %v852 = vrcp.pop %v851
      %v853 = vmul.f32 %v844, %v852
      %v854 = vpack.c.bf16 %v853, %v853
      %v856 = vsel %vm361, %v854, 0
      %v858 = vsel %vm365, %v818, 0
      %860 = vmatpush.bf16.msra.mxu0 0
      %861 = vmatpush.bf16.msra.mxu0 0
      %862 = vmatpush.bf16.msra.mxu0 0
      %863 = vmatpush.bf16.msra.mxu0 0
      %864 = vmatpush.bf16.msra.mxu0 0
      %865 = vmatpush.bf16.msra.mxu0 0
      %866 = vmatpush.bf16.msra.mxu0 0
      %867 = vmatpush.bf16.msra.mxu0 %v858
      %868 = vmatmul.bf16.gmra.mxu0 %v856
      %v869 = vpop.f32.mrf.mxu0
      %v870 = vadd.f32 %v817, %v869
      %v871 = vpop.f32.mrf.mxu0
      %872 = vdwg.mxu0
      %v873 = vsel %vm465, %v870, 0.0
      %v874 = vrot.slane %v873, 4
      %v875 = vadd.f32 %v873, %v874
      %v876 = vrot.slane %v875, 2
      %v877 = vadd.f32 %v875, %v876
      %v878 = vrot.slane %v877, 1
      %v879 = vadd.f32 %v877, %v878
      %v880 = vmul.f32 %v879, 0.125
      %v881 = vpack.c.bf16 %v880, %v880
      %v883 = vsel %vm465, %v881, 0
      %885 = vmatpush.bf16.msra.mxu0 0
      %886 = vmatpush.bf16.msra.mxu0 0
      %887 = vmatpush.bf16.msra.mxu0 0
      %888 = vmatpush.bf16.msra.mxu0 0
      %889 = vmatpush.bf16.msra.mxu0 0
      %890 = vmatpush.bf16.msra.mxu0 0
      %891 = vmatpush.bf16.msra.mxu0 %v332
      %892 = vmatpush.bf16.msra.mxu0 %v331
      %893 = vmatmul.bf16.gmra.mxu0 %v883
      %v894 = vpop.f32.mrf.mxu0
      %v895 = vadd.f32 %v333, %v894
      %v896 = vpop.f32.mrf.mxu0
      %897 = vdwg.mxu0
      %v898 = vmax.f32 %v895, 0.0
      %v899 = vpack.c.bf16 %v898, %v898
      %v901 = vsel %vm465, %v899, 0
      %903 = vmatpush.bf16.msra.mxu0 0
      %904 = vmatpush.bf16.msra.mxu0 0
      %905 = vmatpush.bf16.msra.mxu0 0
      %906 = vmatpush.bf16.msra.mxu0 0
      %907 = vmatpush.bf16.msra.mxu0 0
      %908 = vmatpush.bf16.msra.mxu0 0
      %909 = vmatpush.bf16.msra.mxu0 %v339
      %910 = vmatpush.bf16.msra.mxu0 %v338
      %911 = vmatmul.bf16.gmra.mxu0 %v901
      %v912 = vpop.f32.mrf.mxu0
      %v913 = vadd.f32 %v340, %v912
      %v914 = vpop.f32.mrf.mxu0
      %915 = vdwg.mxu0
      %v916 = vmax.f32 %v913, 0.0
      %v917 = vpack.c.bf16 %v916, %v916
      %v919 = vsel %vm465, %v917, 0
      %921 = vmatpush.bf16.msra.mxu0 0
      %922 = vmatpush.bf16.msra.mxu0 0
      %923 = vmatpush.bf16.msra.mxu0 0
      %924 = vmatpush.bf16.msra.mxu0 0
      %925 = vmatpush.bf16.msra.mxu0 0
      %926 = vmatpush.bf16.msra.mxu0 0
      %927 = vmatpush.bf16.msra.mxu0 %v346
      %928 = vmatpush.bf16.msra.mxu0 %v345
      %929 = vmatmul.bf16.gmra.mxu0 %v919
      %v930 = vpop.f32.mrf.mxu0
      %v931 = vadd.f32 %v347, %v930
      %v932 = vpop.f32.mrf.mxu0
      %933 = vdwg.mxu0
      %934 = vst [vmem:[%s301] sm:$0x1] %v931
      %p935 = scmp.lt.s32.totalorder %s17, 7
      %s936 = scalar_select %p935, %s17, 7
      %s937 = scalar_lea.vmem %s6, %s936
      // Predicated region
      $region45: #{sampn_forward.1} parent=43 // pred_check
        %p938 = pneg %p181
      $region46: #{sampn_forward.1} parent=43 // pred_check_branch
        %940 = sbr.rel (%p938) target = $region48
      $region47: #{sampn_forward.1} parent=43 // pred_region
        _
      $region48: #{sampn_forward.1} parent=43 // pred_fallthru
        _
    $region44: #{sampn_forward.1} parent=5 // pred_fallthru
      _
    %p941 = scmp.le.s32.totalorder 2, %s12
    // Predicated region
    $region49: #{sampn_forward.1} parent=5 // pred_check
      %p942 = pneg %p941
    $region50: #{sampn_forward.1} parent=5 // pred_check_branch
      %944 = sbr.rel (%p942) target = $region52
    $region51: #{sampn_forward.1} parent=5 // pred_region
      %s945 = ssub.s32 %s12, 2
      // Predicated region
      $region53: #{sampn_forward.1} parent=51 // pred_check
        %p946 = pneg %p187
      $region54: #{sampn_forward.1} parent=51 // pred_check_branch
        %948 = sbr.rel (%p946) target = $region56
      $region55: #{sampn_forward.1} parent=51 // pred_region
        %p949 = scmp.lt.s32.totalorder %s18, 7
        %s950 = scalar_select %p949, %s18, 7
        %s951 = scalar_lea.vmem %s6, %s950
      $region56: #{sampn_forward.1} parent=51 // pred_fallthru
        _
    $region52: #{sampn_forward.1} parent=5 // pred_fallthru
      _
  $region6: #{sampn_forward.1} parent=0 // loop_footer
    %s16 = sadd.s32 1, %s12
  $region7: #{sampn_forward.1} parent=0 // loop_footer_branch
    %11 = sbr.rel target = $region3
  $region8: #{sampn_forward.1} parent=0 // loop_exit
    _

</llo_original>
